<compile_context>
chip_gen: v5e
topology: v5e:2x2
jax: 0.10.0
libtpu: 0.0.40
codegen_flags: <defaults>
</compile_context>

<pallas_src>
import functools

import jax
import jax.numpy as jnp
from jax import lax
from jax.experimental import pallas as pl
from jax.experimental.pallas import tpu as pltpu

EPS = 1e-5
LANE = 128


def _round_up(n, m):
    return (n + m - 1) // m * m


# ----------------------------------------------------------------------------
# Kernels
# ----------------------------------------------------------------------------
def _fused_kernel(x_ref, gamma_ref, beta_ref, w_ref, b_ref, o_ref, *, mxu_dtype):
    """Whole batch in one VMEM tile: BN stats in-kernel, then Linear."""
    x = x_ref[...].astype(jnp.float32)                          # (B, C)

    # Training-mode BatchNorm1d: batch mean + biased variance over batch dim.
    # (axis=0 reduce -> XLU, rsqrt -> EUP; both off the critical VALU/MXU path)
    mean = jnp.mean(x, axis=0, keepdims=True)                   # (1, C)
    centered = x - mean
    var = jnp.mean(centered * centered, axis=0, keepdims=True)  # biased
    x_hat = centered * lax.rsqrt(var + EPS)
    x2 = x_hat * gamma_ref[...] + beta_ref[...]                 # affine, f32

    # Linear: x2 @ W.T with W kept in (M_pad, C) PyTorch layout.
    y = lax.dot_general(
        x2.astype(mxu_dtype), w_ref[...].astype(mxu_dtype),
        dimension_numbers=(((1,), (1,)), ((), ())),
        preferred_element_type=jnp.float32)                     # (B, M_pad)
    o_ref[...] = (y + b_ref[...]).astype(o_ref.dtype)


def _stats_kernel(x_ref, stats_ref):
    """Pass 1: accumulate per-feature sum / sum-of-squares over batch tiles."""
    @pl.when(pl.program_id(0) == 0)
    def _():
        stats_ref[...] = jnp.zeros_like(stats_ref)

    x = x_ref[...].astype(jnp.float32)                          # (TB, C)
    stats_ref[0:1, :] += jnp.sum(x, axis=0, keepdims=True)
    stats_ref[1:2, :] += jnp.sum(x * x, axis=0, keepdims=True)


def _bn_linear_kernel(stats_ref, x_ref, gamma_ref, beta_ref, w_ref, b_ref,
                      o_ref, *, batch_size, mxu_dtype):
    """Pass 2: normalize with global stats, then Linear. Batch axis parallel."""
    x = x_ref[...].astype(jnp.float32)                          # (TB, C)
    inv_n = 1.0 / batch_size                                    # compile-time const
    mean = stats_ref[0:1, :] * inv_n                            # (1, C)
    # Biased batch variance: E[x^2] - E[x]^2 (fine in f32 for normalized data).
    var = stats_ref[1:2, :] * inv_n - mean * mean
    x_hat = (x - mean) * lax.rsqrt(var + EPS)
    x2 = x_hat * gamma_ref[...] + beta_ref[...]

    y = lax.dot_general(
        x2.astype(mxu_dtype), w_ref[...].astype(mxu_dtype),
        dimension_numbers=(((1,), (1,)), ((), ())),
        preferred_element_type=jnp.float32)                     # (TB, M_pad)
    o_ref[...] = (y + b_ref[...]).astype(o_ref.dtype)


# ----------------------------------------------------------------------------
# Wrapper
# ----------------------------------------------------------------------------
def clinical_embedding_net(x, gamma, beta, weight, bias, *,
                           batch_tile=256, mxu_dtype=jnp.float32):
    """Forward of ClinicalEmbeddingNet: y = Linear(BatchNorm1d(x)).

    x: (B, C); gamma/beta: (C,) BN affine; weight: (M, C) PyTorch layout;
    bias: (M,). Training-mode BN (biased batch stats, eps=1e-5).
    """
    B, C = x.shape
    M = weight.shape[0]
    out_dtype = x.dtype

    # Lane-dense output: pad out_features to a multiple of 128 with zero rows
    # so the kernel's output store is a full-lane (unmasked) vst.  Padded
    # output columns are exactly 0 and get sliced off below.
    M_pad = _round_up(M, LANE)
    w_p = jnp.pad(weight, ((0, M_pad - M), (0, 0)))             # (M_pad, C)
    b_p = jnp.pad(bias, (0, M_pad - M)).reshape(1, M_pad)
    gamma2 = gamma.reshape(1, C)
    beta2 = beta.reshape(1, C)

    if B <= batch_tile or B % batch_tile != 0:
        # Small (or non-divisible) batch: one fused pallas_call, stats computed
        # in-kernel -> minimal fixed launch/DMA overhead.
        full = lambda shape: pl.BlockSpec(shape, lambda: (0,) * len(shape))
        y_pad = pl.pallas_call(
            functools.partial(_fused_kernel, mxu_dtype=mxu_dtype),
            out_shape=jax.ShapeDtypeStruct((B, M_pad), out_dtype),
            grid=(),
            in_specs=[full((B, C)), full((1, C)), full((1, C)),
                      full((M_pad, C)), full((1, M_pad))],
            out_specs=full((B, M_pad)),
        )(x, gamma2, beta2, w_p, b_p)
        return y_pad[:, :M]

    # Tiled two-pass path for a real batch.
    n_tiles = B // batch_tile

    # Pass 1: global BN statistics (reduction axis -> "arbitrary",
    # accumulator output block stays resident across the grid).
    stats = pl.pallas_call(
        _stats_kernel,
        out_shape=jax.ShapeDtypeStruct((2, C), jnp.float32),
        grid=(n_tiles,),
        in_specs=[pl.BlockSpec((batch_tile, C), lambda i: (i, 0))],
        out_specs=pl.BlockSpec((2, C), lambda i: (0, 0)),
        compiler_params=pltpu.CompilerParams(
            dimension_semantics=("arbitrary",)),
    )(x)

    # Pass 2: normalize + Linear, batch axis "parallel" (v7x: both TCs work).
    y_pad = pl.pallas_call(
        functools.partial(_bn_linear_kernel, batch_size=B, mxu_dtype=mxu_dtype),
        out_shape=jax.ShapeDtypeStruct((B, M_pad), out_dtype),
        grid=(n_tiles,),
        in_specs=[
            pl.BlockSpec((2, C), lambda i: (0, 0)),             # global stats
            pl.BlockSpec((batch_tile, C), lambda i: (i, 0)),    # x tile
            pl.BlockSpec((1, C), lambda i: (0, 0)),             # gamma
            pl.BlockSpec((1, C), lambda i: (0, 0)),             # beta
            pl.BlockSpec((M_pad, C), lambda i: (0, 0)),         # weight
            pl.BlockSpec((1, M_pad), lambda i: (0, 0)),         # bias
        ],
        out_specs=pl.BlockSpec((batch_tile, M_pad), lambda i: (i, 0)),
        compiler_params=pltpu.CompilerParams(
            dimension_semantics=("parallel",)),
    )(stats, x, gamma2, beta2, w_p, b_p)
    return y_pad[:, :M]


# ----------------------------------------------------------------------------
# Pure-JAX reference (training-mode BN -> Linear)
# ----------------------------------------------------------------------------
def reference(x, gamma, beta, weight, bias):
    x = x.astype(jnp.float32)
    mean = jnp.mean(x, axis=0, keepdims=True)
    var = jnp.mean((x - mean) ** 2, axis=0, keepdims=True)
    x2 = gamma * (x - mean) / jnp.sqrt(var + EPS) + beta
    return x2 @ weight.T + bias


if __name__ == "__main__":
    key = jax.random.PRNGKey(0)
    kx, kw, kb, kg, kbeta, kx2 = jax.random.split(key, 6)

    clinical_length = 32   # in_features of hidden1 / num_features of bn1
    m_length = 16          # representation length (out_features)

    # Deterministic synthetic parameters (mirror the module's shapes).
    weight = jax.random.normal(kw, (m_length, clinical_length), jnp.float32) * 0.1
    bias = jax.random.normal(kb, (m_length,), jnp.float32) * 0.1
    gamma = 1.0 + 0.05 * jax.random.normal(kg, (clinical_length,), jnp.float32)
    beta = 0.05 * jax.random.normal(kbeta, (clinical_length,), jnp.float32)

    # 1) Small batch -> single fused kernel (minimal overhead path).
    x_small = jax.random.normal(kx, (8, clinical_length), jnp.float32)
    out_small = jax.block_until_ready(
        clinical_embedding_net(x_small, gamma, beta, weight, bias))
    ref_small = reference(x_small, gamma, beta, weight, bias)
    assert out_small.shape == (8, m_length)
    assert jnp.allclose(out_small, ref_small, atol=1e-4, rtol=1e-4)

    # 2) Larger batch -> tiled two-pass path (global BN stats, parallel axis).
    B = 512
    x_big = jax.random.normal(kx2, (B, clinical_length), jnp.float32)
    out_big = jax.block_until_ready(
        clinical_embedding_net(x_big, gamma, beta, weight, bias,
                               batch_tile=128))
    ref_big = reference(x_big, gamma, beta, weight, bias)
    assert out_big.shape == (B, m_length)
    assert jnp.allclose(out_big, ref_big, atol=1e-4, rtol=1e-4)

    # 3) Same, feeding the MXU bf16 (v6e/v7x fast path); BN math stays f32.
    out_bf16 = jax.block_until_ready(
        clinical_embedding_net(x_big, gamma, beta, weight, bias,
                               batch_tile=128, mxu_dtype=jnp.bfloat16))
    assert jnp.allclose(out_bf16, ref_big, atol=5e-2, rtol=5e-2)

    print("KERNEL_OK")
</pallas_src>

<mosaic_0001>
module attributes {stable_mosaic.version = 11 : i64} {
  func.func @_fused_kernel(%arg0: memref<8x32xf32, #tpu.memory_space<vmem>>, %arg1: memref<1x32xf32, #tpu.memory_space<vmem>>, %arg2: memref<1x32xf32, #tpu.memory_space<vmem>>, %arg3: memref<128x32xf32, #tpu.memory_space<vmem>>, %arg4: memref<1x128xf32, #tpu.memory_space<vmem>>, %arg5: memref<8x128xf32, #tpu.memory_space<vmem>>) attributes {dimension_semantics = [], scalar_prefetch = 0 : i64, scratch_operands = 0 : i64, tpu.core_type = #tpu.core_type<tc>} {
    %c0 = arith.constant 0 : index
    %c0_0 = arith.constant 0 : index
    %0 = vector.load %arg0[%c0, %c0_0] : memref<8x32xf32, #tpu.memory_space<vmem>>, vector<8x32xf32>
    %cst = arith.constant dense<0.000000e+00> : vector<32xf32>
    %1 = vector.multi_reduction <add>, %0, %cst [0] : vector<8x32xf32> to vector<32xf32>
    %2 = vector.shape_cast %1 : vector<32xf32> to vector<1x32xf32>
    %cst_1 = arith.constant 8.000000e+00 : f32
    %3 = vector.broadcast %cst_1 : f32 to vector<1x32xf32>
    %4 = arith.divf %2, %3 : vector<1x32xf32>
    %5 = vector.broadcast %4 : vector<1x32xf32> to vector<8x32xf32>
    %6 = arith.subf %0, %5 : vector<8x32xf32>
    %7 = arith.mulf %6, %6 : vector<8x32xf32>
    %cst_2 = arith.constant dense<0.000000e+00> : vector<32xf32>
    %8 = vector.multi_reduction <add>, %7, %cst_2 [0] : vector<8x32xf32> to vector<32xf32>
    %9 = vector.shape_cast %8 : vector<32xf32> to vector<1x32xf32>
    %cst_3 = arith.constant 8.000000e+00 : f32
    %10 = vector.broadcast %cst_3 : f32 to vector<1x32xf32>
    %11 = arith.divf %9, %10 : vector<1x32xf32>
    %cst_4 = arith.constant 9.99999974E-6 : f32
    %12 = vector.broadcast %cst_4 : f32 to vector<1x32xf32>
    %13 = arith.addf %11, %12 : vector<1x32xf32>
    %14 = math.rsqrt %13 : vector<1x32xf32>
    %15 = vector.broadcast %14 : vector<1x32xf32> to vector<8x32xf32>
    %16 = arith.mulf %6, %15 : vector<8x32xf32>
    %c0_5 = arith.constant 0 : index
    %c0_6 = arith.constant 0 : index
    %17 = vector.load %arg1[%c0_5, %c0_6] : memref<1x32xf32, #tpu.memory_space<vmem>>, vector<1x32xf32>
    %18 = vector.broadcast %17 : vector<1x32xf32> to vector<8x32xf32>
    %19 = arith.mulf %16, %18 : vector<8x32xf32>
    %c0_7 = arith.constant 0 : index
    %c0_8 = arith.constant 0 : index
    %20 = vector.load %arg2[%c0_7, %c0_8] : memref<1x32xf32, #tpu.memory_space<vmem>>, vector<1x32xf32>
    %21 = vector.broadcast %20 : vector<1x32xf32> to vector<8x32xf32>
    %22 = arith.addf %19, %21 : vector<8x32xf32>
    %c0_9 = arith.constant 0 : index
    %c0_10 = arith.constant 0 : index
    %23 = vector.load %arg3[%c0_9, %c0_10] : memref<128x32xf32, #tpu.memory_space<vmem>>, vector<128x32xf32>
    %cst_11 = arith.constant dense<0.000000e+00> : vector<8x128xf32>
    %24 = tpu.matmul %22, %23, %cst_11 {dimension_numbers = #tpu.dot_dimension_numbers<[1], [1], [0], [0], [0, 0, 1, 0], [], []>} : vector<8x32xf32>, vector<128x32xf32>, vector<8x128xf32> -> vector<8x128xf32>
    %c0_12 = arith.constant 0 : index
    %c0_13 = arith.constant 0 : index
    %25 = vector.load %arg4[%c0_12, %c0_13] : memref<1x128xf32, #tpu.memory_space<vmem>>, vector<1x128xf32>
    %26 = vector.broadcast %25 : vector<1x128xf32> to vector<8x128xf32>
    %27 = arith.addf %24, %26 : vector<8x128xf32>
    %c0_14 = arith.constant 0 : index
    %c0_15 = arith.constant 0 : index
    %28 = vector.load %arg5[%c0_14, %c0_15] : memref<8x128xf32, #tpu.memory_space<vmem>>, vector<8x128xf32>
    tpu.vector_store %arg5[%c0_14, %c0_15], %27 {strides = array<i32>} : memref<8x128xf32, #tpu.memory_space<vmem>>, vector<8x128xf32>,
    return
  }
}

</mosaic_0001>

<llo_original>
// kernel: tpu_custom_call.1
$region0: #{tpu_custom_call.1}
  #allocation0 [shape = 'u32[]', space=smem, size = 0x4, offset = 0x4, fixed_abs, tag = 'smem constant byte address 0x4 - core index']
  #allocation1 [shape = 'u32[72,128]{1,0:T(1,128)}', space=vmem, size = 0x9000, scoped, tag = 'internal scratch']
  %s0 = inlined_call_operand.vmem [shape: f32[8,32], index: 0, kind: input, shape index: {}]
  %s1 = inlined_call_operand.vmem [shape: f32[1,32], index: 1, kind: input, shape index: {}]
  %s2 = inlined_call_operand.vmem [shape: f32[1,32], index: 2, kind: input, shape index: {}]
  %s3 = inlined_call_operand.vmem [shape: f32[128,32], index: 3, kind: input, shape index: {}]
  %s4 = inlined_call_operand.vmem [shape: f32[1,128], index: 4, kind: input, shape index: {}]
  %s5 = inlined_call_operand.hbm [shape: f32[8,128], index: 5, kind: output, shape index: {}]
  %s6 = sld [smem:[#allocation0]]
  $region30: #{tpu_custom_call.1} parent=0
    _
  %s8 = ssub.s32 1, %s6
  %s9 = scalar_select 0, %s8, %s6
  $region1: #{tpu_custom_call.1} parent=0
    #allocation2 [shape = 'u8[4096]{0}', space=vmem, size = 0x1000, scoped, tag = 'output window, operand 0, single buffered']
    #allocation3 [shape = 's32[1]{0}', space=sflag, size = 0x4, scoped, tag = 'scoped memory for tpu_custom_call.1']
    %10 = vsyncpa [#allocation3], 0
    // Predicated region
    $region2: #{tpu_custom_call.1} parent=1 // pred_check
      _
    $region3: #{tpu_custom_call.1} parent=1 // pred_check_branch
      %12 = sbr.rel (0) target = $region5
    $region4: #{tpu_custom_call.1} parent=1 // pred_region
      _
    $region5: #{tpu_custom_call.1} parent=1 // pred_fallthru
      _
    // Predicated region
    $region6: #{tpu_custom_call.1} parent=1 // pred_check
      _
    $region7: #{tpu_custom_call.1} parent=1 // pred_check_branch
      %14 = sbr.rel (0) target = $region9
    $region8: #{tpu_custom_call.1} parent=1 // pred_region
      _
    $region9: #{tpu_custom_call.1} parent=1 // pred_fallthru
      _
    // Predicated region
    $region10: #{tpu_custom_call.1} parent=1 // pred_check
      _
    $region11: #{tpu_custom_call.1} parent=1 // pred_check_branch
      %16 = sbr.rel (0) target = $region13
    $region12: #{tpu_custom_call.1} parent=1 // pred_region
      _
    $region13: #{tpu_custom_call.1} parent=1 // pred_fallthru
      _
    // Predicated region
    $region14: #{tpu_custom_call.1} parent=1 // pred_check
      _
    $region15: #{tpu_custom_call.1} parent=1 // pred_check_branch
      %18 = sbr.rel (0) target = $region17
    $region16: #{tpu_custom_call.1} parent=1 // pred_region
      _
    $region17: #{tpu_custom_call.1} parent=1 // pred_fallthru
      _
    // Predicated region
    $region18: #{tpu_custom_call.1} parent=1 // pred_check
      _
    $region19: #{tpu_custom_call.1} parent=1 // pred_check_branch
      %20 = sbr.rel (0) target = $region21
    $region20: #{tpu_custom_call.1} parent=1 // pred_region
      _
    $region21: #{tpu_custom_call.1} parent=1 // pred_fallthru
      _
    %v21 = vld [vmem:[%s0] sm:$0xff]
    %vm22 = vcmask 261120
    %v23 = vsel %vm22, %v21, 0.0
    %v24 = vrot.slane %v23, 4
    %v25 = vadd.f32 %v23, %v24
    %v26 = vrot.slane %v25, 2
    %v27 = vadd.f32 %v25, %v26
    %v28 = vrot.slane %v27, 1
    %v29 = vadd.f32 %v27, %v28
    %v30 = vrcp.pop 8.0
    %v31 = vmul.f32 8.0, %v30
    %v32 = vsub.f32 1.0, %v31
    %v33 = vmul.f32 %v30, %v32
    %v34 = vadd.f32 %v30, %v33
    %vm35 = vweird.f32 %v30
    %v36 = vsel %vm35, %v30, %v34
    %v37 = vmul.f32 %v29, %v36
    %v38 = vsub.f32 %v21, %v37
    %v39 = vmul.f32 %v38, %v38
    %v40 = vsel %vm22, %v39, 0.0
    %v41 = vrot.slane %v40, 4
    %v42 = vadd.f32 %v40, %v41
    %v43 = vrot.slane %v42, 2
    %v44 = vadd.f32 %v42, %v43
    %v45 = vrot.slane %v44, 1
    %v46 = vadd.f32 %v44, %v45
    %v47 = vmul.f32 %v46, %v36
    %v48 = vadd.f32 %v47, 1e-05
    %v49 = vrsqrt.pop %v48
    %v50 = vmul.f32 %v49, %v48
    %v51 = vmul.f32 %v50, %v49
    %v52 = vmul.f32 0.5, %v51
    %v53 = vsub.f32 1.5, %v52
    %v54 = vmul.f32 %v49, %v53
    %vm55 = vweird.f32 %v48
    %vm56 = vweird.f32 %v49
    %vm57 = vmor %vm55, %vm56
    %v58 = vsel %vm57, %v49, %v54
    %v59 = vmul.f32 %v38, %v58
    %v60 = vld [vmem:[%s1] sm:$0x1]
    %v62 = vperm.slane %v60, 0
    %v64 = vmul.f32 %v59, %v62
    %v65 = vld [vmem:[%s2] sm:$0x1]
    %v67 = vperm.slane %v65, 0
    %v69 = vadd.f32 %v64, %v67
    %v70 = vld [vmem:[%s3] sm:$0xff]
    %v71 = vld [vmem:[%s3 + $0x8] sm:$0xff]
    %v72 = vld [vmem:[%s3 + $0x10] sm:$0xff]
    %v73 = vld [vmem:[%s3 + $0x18] sm:$0xff]
    %v74 = vld [vmem:[%s3 + $0x20] sm:$0xff]
    %v75 = vld [vmem:[%s3 + $0x28] sm:$0xff]
    %v76 = vld [vmem:[%s3 + $0x30] sm:$0xff]
    %v77 = vld [vmem:[%s3 + $0x38] sm:$0xff]
    %v78 = vld [vmem:[%s3 + $0x40] sm:$0xff]
    %v79 = vld [vmem:[%s3 + $0x48] sm:$0xff]
    %v80 = vld [vmem:[%s3 + $0x50] sm:$0xff]
    %v81 = vld [vmem:[%s3 + $0x58] sm:$0xff]
    %v82 = vld [vmem:[%s3 + $0x60] sm:$0xff]
    %v83 = vld [vmem:[%s3 + $0x68] sm:$0xff]
    %v84 = vld [vmem:[%s3 + $0x70] sm:$0xff]
    %v85 = vld [vmem:[%s3 + $0x78] sm:$0xff]
    %v86 = vld [vmem:[%s4] sm:$0x1]
    %v88 = vperm.slane %v86, 0
    %v91 = vsel %vm22, %v69, 0
    %v94 = vsel %vm22, %v70, 0
    %v97 = vsel %vm22, %v71, 0
    %v100 = vsel %vm22, %v72, 0
    %v103 = vsel %vm22, %v73, 0
    %v106 = vsel %vm22, %v74, 0
    %v109 = vsel %vm22, %v75, 0
    %v112 = vsel %vm22, %v76, 0
    %v115 = vsel %vm22, %v77, 0
    %v118 = vsel %vm22, %v78, 0
    %v121 = vsel %vm22, %v79, 0
    %v124 = vsel %vm22, %v80, 0
    %v127 = vsel %vm22, %v81, 0
    %v130 = vsel %vm22, %v82, 0
    %v133 = vsel %vm22, %v83, 0
    %v136 = vsel %vm22, %v84, 0
    %v139 = vsel %vm22, %v85, 0
    %141 = vmatpush.xpose.msra.mxu0 %v139
    %142 = vmatpush.xpose.msra.mxu0 %v136
    %143 = vmatpush.xpose.msra.mxu0 %v133
    %144 = vmatpush.xpose.msra.mxu0 %v130
    %145 = vmatpush.xpose.msra.mxu0 %v127
    %146 = vmatpush.xpose.msra.mxu0 %v124
    %147 = vmatpush.xpose.msra.mxu0 %v121
    %148 = vmatpush.xpose.msra.mxu0 %v118
    %149 = vmatpush.xpose.msra.mxu0 %v115
    %150 = vmatpush.xpose.msra.mxu0 %v112
    %151 = vmatpush.xpose.msra.mxu0 %v109
    %152 = vmatpush.xpose.msra.mxu0 %v106
    %153 = vmatpush.xpose.msra.mxu0 %v103
    %154 = vmatpush.xpose.msra.mxu0 %v100
    %155 = vmatpush.xpose.msra.mxu0 %v97
    %156 = vmatpush.xpose.msra.mxu0 %v94
    %157 = vmatmul.f32.gmra.mxu0 %v91
    %v158 = vpop.f32.mrf.mxu0
    %v159 = vadd.f32 %v88, %v158
    %160 = vdwg.mxu0
    %161 = vst [vmem:[#allocation2] sm:$0xff] %v159
    // Predicated region
    $region22: #{tpu_custom_call.1} parent=1 // pred_check
      _
    $region23: #{tpu_custom_call.1} parent=1 // pred_check_branch
      %163 = sbr.rel (0) target = $region25
    $region24: #{tpu_custom_call.1} parent=1 // pred_region
      %165 = vsyncadd [#allocation3], 0
      %s167 = sshll.u32 [#allocation2], 4
      %s168 = int_to_ptr.vmem [resolvable:$true] %s167
      %s169 = sshll.u32 %s5, 4
      %s170 = int_to_ptr.hbm [resolvable:$true] %s169
      %172 = dma.vmem_to_hbm [thread:$0]  %s168, 128, %s170, [#allocation3]
    $region25: #{tpu_custom_call.1} parent=1 // pred_fallthru
      _
    // Predicated region
    $region26: #{tpu_custom_call.1} parent=1 // pred_check
      _
    $region27: #{tpu_custom_call.1} parent=1 // pred_check_branch
      %174 = sbr.rel (0) target = $region29
    $region28: #{tpu_custom_call.1} parent=1 // pred_region
      %176 = dma.done [#allocation3], 128
    $region29: #{tpu_custom_call.1} parent=1 // pred_fallthru
      _
    %177 = vsyncpa [#allocation3], 1

</llo_original>
